<compile_context>
chip_gen: v7x
topology: tpu7x:2x2x1
jax: 0.10.0
libtpu: 0.0.40
codegen_flags: <defaults>
</compile_context>

<pallas_src>
import functools

import jax
import jax.numpy as jnp
import numpy as np
from jax.experimental import pallas as pl
from jax.experimental.pallas import tpu as pltpu

_EPS = 1e-5

_COMPILER_PARAMS = pltpu.CompilerParams(
    dimension_semantics=("parallel",),        # image blocks are independent
    vmem_limit_bytes=32 * 1024 * 1024,        # explicit scoped-VMEM budget (v5e/v6e/v7x safe)
)


# -----------------------------------------------------------------------------
# Host-side constant folding
# -----------------------------------------------------------------------------
def _x_reflection_selectors(W):
    """S_kx[x_in, x_out] = multiplicity with which tap kx of output column x_out
    reads input column x_in under ReflectionPad2d(1) along W (W >= 2)."""
    sels = []
    for dx in (-1, 0, 1):
        s = np.zeros((W, W), np.float32)
        for xo in range(W):
            xi = xo + dx
            if xi < 0:
                xi = 1                     # reflect(-1) -> 1
            elif xi >= W:
                xi = W - 2                 # reflect(W)  -> W-2
            s[xi, xo] += 1.0
        sels.append(s)
    return sels


def _banded_conv_weights(w_oihw, W):
    """Fold a 3x3 conv weight (Cout, Cin, 3, 3) + x-reflection-pad into three
    banded (W*C, W*C) matrices, one per y tap.  Each band is ~3/W dense: fine
    for W*C ~ 128-256; use a narrower-band form for large W once MXU-bound."""
    sels = _x_reflection_selectors(W)
    bands = []
    for ky in range(3):
        t = None
        for kx, s in enumerate(sels):
            # kron block [x_in*C+ci, x_out*C+co] = S[x_in,x_out] * w[co,ci,ky,kx]
            contrib = jnp.kron(jnp.asarray(s), jnp.transpose(w_oihw[:, :, ky, kx]))
            t = contrib if t is None else t + contrib
        bands.append(t)
    # bf16 operands for the bf16-native MXU (f32 accumulation in the kernel).
    return jnp.stack(bands, axis=0).astype(jnp.bfloat16)       # (3, W*C, W*C)


def _channel_sum_matrix(W, C):
    """R[x*C+c, x'*C+c'] = (c == c'):  per-lane stats -> per-channel sums
    broadcast back onto the lane layout, done with one tiny MXU matmul."""
    return jnp.kron(jnp.ones((W, W), jnp.float32), jnp.eye(C, dtype=jnp.float32))


# -----------------------------------------------------------------------------
# In-kernel helpers
# -----------------------------------------------------------------------------
def _banded_conv(a_f32, t_ref, H):
    """3x3 conv with ReflectionPad(1) folded in, on a block of whole images.

    a_f32: (B*H, W*C) f32 rows of B stacked images.  t_ref: (3, W*C, W*C) bf16.
    y-direction = three accumulated matmuls on row-shifted operands (XLU roll
    + per-image boundary select); x-direction + x-reflection live in T."""
    BH, WC = a_f32.shape
    up = pltpu.roll(a_f32, shift=1, axis=0)          # row r <- row r-1 (wraps at 0)
    dn = pltpu.roll(a_f32, shift=BH - 1, axis=0)     # row r <- row r+1 (wraps at BH-1)
    ry = jax.lax.broadcasted_iota(jnp.int32, (BH, WC), 0) % H
    up = jnp.where(ry == 0, dn, up)                  # top row of each image -> row 1
    # rows with ry==H-1 were untouched above (H >= 2), so `up` there is still raw
    dn = jnp.where(ry == H - 1, up, dn)              # bottom row -> row H-2
    acc = jnp.dot(up.astype(jnp.bfloat16), t_ref[0],
                  preferred_element_type=jnp.float32)
    acc = acc + jnp.dot(a_f32.astype(jnp.bfloat16), t_ref[1],
                        preferred_element_type=jnp.float32)
    acc = acc + jnp.dot(dn.astype(jnp.bfloat16), t_ref[2],
                        preferred_element_type=jnp.float32)
    return acc                                        # (B*H, W*C) f32


def _write_stats(s_ref, conv_f32, r_ref):
    """Write per-channel partial BN stats (broadcast to the lane layout) as a
    full 8-sublane tile: rows = [sum, sum_sq, 0, 0, 0, 0, 0, 0]."""
    WC = conv_f32.shape[1]
    per_lane = jnp.concatenate(
        [jnp.sum(conv_f32, axis=0, keepdims=True),
         jnp.sum(conv_f32 * conv_f32, axis=0, keepdims=True),
         jnp.zeros((6, WC), jnp.float32)], axis=0)               # (8, WC)
    # Reduce over x within the lane dim (and broadcast back) via the MXU.
    s_ref[0] = jnp.dot(per_lane, r_ref[...], preferred_element_type=jnp.float32)


def _fold_bn(st, gamma, beta, count):
    """Partial stats (G, 8, WC) -> per-lane scale/shift (1, WC)."""
    tot = jnp.sum(st, axis=0)                                    # (8, WC)
    inv = 1.0 / count
    mean = tot[0:1] * inv                                        # (1, WC)
    var = jnp.maximum(tot[1:2] * inv - mean * mean, 0.0)         # clamp one-pass var
    scale = gamma * jax.lax.rsqrt(var + _EPS)
    shift = beta - mean * scale
    return scale, shift


# -----------------------------------------------------------------------------
# Kernels
# -----------------------------------------------------------------------------
def _conv1_kernel(x_ref, t_ref, r_ref, y_ref, s_ref, *, H):
    conv = _banded_conv(x_ref[...], t_ref, H)          # f32 accumulator
    y_ref[...] = conv.astype(jnp.bfloat16)             # bf16 intermediate to HBM
    _write_stats(s_ref, conv, r_ref)                   # stats from the f32 values


def _bn_relu_conv2_kernel(y1_ref, st_ref, g_ref, b_ref, t_ref, r_ref,
                          y2_ref, s_ref, *, H, count):
    scale, shift = _fold_bn(st_ref[...], g_ref[...], b_ref[...], count)
    h = jnp.maximum(y1_ref[...].astype(jnp.float32) * scale + shift, 0.0)
    conv = _banded_conv(h, t_ref, H)
    y2_ref[...] = conv.astype(jnp.bfloat16)
    _write_stats(s_ref, conv, r_ref)


def _bn_residual_kernel(y2_ref, x_ref, st_ref, g_ref, b_ref, o_ref, *, count):
    scale, shift = _fold_bn(st_ref[...], g_ref[...], b_ref[...], count)
    o_ref[...] = y2_ref[...].astype(jnp.float32) * scale + shift + x_ref[...]


# -----------------------------------------------------------------------------
# Wrapper
# -----------------------------------------------------------------------------
def _pick_images_per_block(N, H, WC, target_bytes=2 << 20):
    """Largest divisor of N whose f32 block fits ~2 MiB and keeps the sublane
    dim a multiple of 16 (bf16 tile), falling back to the smallest legal one."""
    cands = [b for b in range(1, N + 1)
             if N % b == 0 and ((b * H) % 16 == 0 or b == N)]
    fitting = [b for b in cands if b * H * WC * 4 <= target_bytes]
    return max(fitting) if fitting else min(cands)


def resblock_forward(x_nchw, params):
    """Pallas ResBlock forward (training-mode BatchNorm).  x: (N, C, H, W) f32.
    Requires H >= 2 and W >= 2 (same constraint as ReflectionPad2d(1))."""
    N, C, H, W = x_nchw.shape
    assert H >= 2 and W >= 2, "ReflectionPad2d(1) requires H, W >= 2"
    WC = W * C

    # Boundary relayout only (interface parity with PyTorch); kernels are NHWC-flat.
    x2d = jnp.transpose(x_nchw, (0, 2, 3, 1)).reshape(N * H, WC).astype(jnp.float32)

    # Conv biases b1/b2 intentionally ignored: training-mode BatchNorm subtracts
    # the batch mean right after each conv, which cancels them exactly.
    t1 = _banded_conv_weights(params["w1"].astype(jnp.float32), W)   # (3, WC, WC) bf16
    t2 = _banded_conv_weights(params["w2"].astype(jnp.float32), W)
    r = _channel_sum_matrix(W, C)                                    # (WC, WC) f32

    g1 = jnp.tile(params["gamma1"].astype(jnp.float32), W).reshape(1, WC)
    b1 = jnp.tile(params["beta1"].astype(jnp.float32), W).reshape(1, WC)
    g2 = jnp.tile(params["gamma2"].astype(jnp.float32), W).reshape(1, WC)
    b2 = jnp.tile(params["beta2"].astype(jnp.float32), W).reshape(1, WC)

    B = _pick_images_per_block(N, H, WC)     # images per grid step
    G = N // B                               # grid length
    BH = B * H
    count = float(N * H * W)                 # BN sample count per channel

    def act():
        return pl.BlockSpec((BH, WC), lambda i: (i, 0))

    def const(shape):
        zeros = (0,) * len(shape)
        return pl.BlockSpec(shape, lambda i: zeros)

    def stats_out():
        return pl.BlockSpec((1, 8, WC), lambda i: (i, 0, 0))

    stats_shape = jax.ShapeDtypeStruct((G, 8, WC), jnp.float32)

    def act_shape(dt):
        return jax.ShapeDtypeStruct((N * H, WC), dt)

    # --- conv1 (pre-BN) + BN1 partial stats ---------------------------------
    y1, st1 = pl.pallas_call(
        functools.partial(_conv1_kernel, H=H),
        grid=(G,),
        in_specs=[act(), const((3, WC, WC)), const((WC, WC))],
        out_specs=[act(), stats_out()],
        out_shape=[act_shape(jnp.bfloat16), stats_shape],
        compiler_params=_COMPILER_PARAMS,
    )(x2d, t1, r)

    # --- BN1 + ReLU + conv2 (pre-BN) + BN2 partial stats --------------------
    y2, st2 = pl.pallas_call(
        functools.partial(_bn_relu_conv2_kernel, H=H, count=count),
        grid=(G,),
        in_specs=[act(), const((G, 8, WC)), const((1, WC)), const((1, WC)),
                  const((3, WC, WC)), const((WC, WC))],
        out_specs=[act(), stats_out()],
        out_shape=[act_shape(jnp.bfloat16), stats_shape],
        compiler_params=_COMPILER_PARAMS,
    )(y1, st1, g1, b1, t2, r)

    # --- BN2 + residual (reuses x2d's buffer for the output) ----------------
    out2d = pl.pallas_call(
        functools.partial(_bn_residual_kernel, count=count),
        grid=(G,),
        in_specs=[act(), act(), const((G, 8, WC)), const((1, WC)), const((1, WC))],
        out_specs=act(),
        out_shape=act_shape(jnp.float32),
        input_output_aliases={1: 0},          # alias x2d -> output
        compiler_params=_COMPILER_PARAMS,
    )(y2, x2d, st2, g2, b2)

    return jnp.transpose(out2d.reshape(N, H, W, C), (0, 3, 1, 2))


# -----------------------------------------------------------------------------
# Pure-JAX reference (NCHW), mirrors the PyTorch forward in training mode
# -----------------------------------------------------------------------------
def resblock_reference(x, params):
    def conv(t, w, b):
        tp = jnp.pad(t, ((0, 0), (0, 0), (1, 1), (1, 1)), mode="reflect")
        out = jax.lax.conv_general_dilated(
            tp, w, (1, 1), "VALID", dimension_numbers=("NCHW", "OIHW", "NCHW"))
        return out + b[None, :, None, None]

    def bn(t, g, be):
        mean = jnp.mean(t, axis=(0, 2, 3), keepdims=True)
        var = jnp.mean((t - mean) ** 2, axis=(0, 2, 3), keepdims=True)
        return ((t - mean) * jax.lax.rsqrt(var + _EPS) * g[None, :, None, None]
                + be[None, :, None, None])

    out = jax.nn.relu(bn(conv(x, params["w1"], params["b1"]),
                         params["gamma1"], params["beta1"]))
    out = bn(conv(out, params["w2"], params["b2"]),
             params["gamma2"], params["beta2"])
    return out + x


if __name__ == "__main__":
    key = jax.random.PRNGKey(0)
    N, C, H, W = 2, 8, 16, 16            # W*C = 128 -> exactly one full lane row
    ks = jax.random.split(key, 8)

    bound = 1.0 / np.sqrt(C * 3 * 3)     # ~ PyTorch Conv2d default init range
    params = {
        "w1": jax.random.uniform(ks[0], (C, C, 3, 3), jnp.float32, -bound, bound),
        "b1": jax.random.uniform(ks[1], (C,), jnp.float32, -bound, bound),
        "w2": jax.random.uniform(ks[2], (C, C, 3, 3), jnp.float32, -bound, bound),
        "b2": jax.random.uniform(ks[3], (C,), jnp.float32, -bound, bound),
        "gamma1": jax.random.uniform(ks[4], (C,), jnp.float32, 0.5, 1.5),
        "beta1": 0.1 * jax.random.normal(ks[5], (C,), jnp.float32),
        "gamma2": jax.random.uniform(ks[6], (C,), jnp.float32, 0.5, 1.5),
        "beta2": 0.1 * jax.random.normal(ks[7], (C,), jnp.float32),
    }
    x = jax.random.normal(jax.random.PRNGKey(1), (N, C, H, W), jnp.float32)

    out = jax.block_until_ready(resblock_forward(x, params))
    ref = jax.block_until_ready(resblock_reference(x, params))

    assert out.shape == x.shape and out.dtype == jnp.float32
    # bf16 MXU operands + bf16 intermediates vs. the f32 XLA reference -> loose tol
    np.testing.assert_allclose(np.asarray(out), np.asarray(ref), atol=5e-2, rtol=5e-2)
    print("KERNEL_OK")
</pallas_src>

<mosaic_0001>
module attributes {stable_mosaic.version = 11 : i64} {
  func.func @_conv1_kernel(%arg0: i32, %arg1: memref<32x128xf32, #tpu.memory_space<vmem>>, %arg2: memref<3x128x128xbf16, #tpu.memory_space<vmem>>, %arg3: memref<128x128xf32, #tpu.memory_space<vmem>>, %arg4: memref<32x128xbf16, #tpu.memory_space<vmem>>, %arg5: memref<1x8x128xf32, #tpu.memory_space<vmem>>) attributes {dimension_semantics = [#tpu.dimension_semantics<parallel>], iteration_bounds = array<i64: 1>, scalar_prefetch = 0 : i64, scratch_operands = 0 : i64, tpu.core_type = #tpu.core_type<tc>, window_params = [{transform_indices = @transform_0, window_bounds = array<i64: 32, 128>}, {pipeline_mode = #tpu.pipeline_mode<synchronous>, transform_indices = @transform_1, window_bounds = array<i64: 3, 128, 128>}, {pipeline_mode = #tpu.pipeline_mode<synchronous>, transform_indices = @transform_2, window_bounds = array<i64: 128, 128>}, {transform_indices = @transform_3, window_bounds = array<i64: 32, 128>}, {transform_indices = @transform_4, window_bounds = array<i64: 1, 8, 128>}]} {
    %c0 = arith.constant 0 : index
    %c0_0 = arith.constant 0 : index
    %0 = vector.load %arg1[%c0, %c0_0] : memref<32x128xf32, #tpu.memory_space<vmem>>, vector<32x128xf32>
    %c1_i32 = arith.constant 1 : i32
    %1 = tpu.dynamic_rotate %0 by %c1_i32 dim 0 : vector<32x128xf32>, i32 -> vector<32x128xf32>
    %c31_i32 = arith.constant 31 : i32
    %2 = tpu.dynamic_rotate %0 by %c31_i32 dim 0 : vector<32x128xf32>, i32 -> vector<32x128xf32>
    %3 = tpu.iota {dimensions = array<i32: 0>} : vector<32x128xi32>
    %c16_i32 = arith.constant 16 : i32
    %c0_i32 = arith.constant 0 : i32
    %4 = arith.cmpi eq, %c16_i32, %c0_i32 : i32
    %c1_i32_1 = arith.constant 1 : i32
    %5 = arith.select %4, %c1_i32_1, %c16_i32 : i32
    %6 = vector.broadcast %5 : i32 to vector<32x128xi32>
    %7 = arith.remsi %3, %6 : vector<32x128xi32>
    %c0_i32_2 = arith.constant 0 : i32
    %8 = vector.broadcast %c0_i32_2 : i32 to vector<32x128xi32>
    %9 = arith.cmpi ne, %7, %8 : vector<32x128xi32>
    %c0_i32_3 = arith.constant 0 : i32
    %10 = vector.broadcast %c0_i32_3 : i32 to vector<32x128xi32>
    %11 = arith.cmpi slt, %7, %10 : vector<32x128xi32>
    %c0_i32_4 = arith.constant 0 : i32
    %12 = arith.cmpi slt, %5, %c0_i32_4 : i32
    %13 = vector.broadcast %12 : i1 to vector<32x128xi1>
    %14 = vector.broadcast %13 : vector<32x128xi1> to vector<32x128xi1>
    %15 = arith.xori %11, %14 : vector<32x128xi1>
    %16 = arith.andi %15, %9 : vector<32x128xi1>
    %17 = vector.broadcast %5 : i32 to vector<32x128xi32>
    %18 = arith.addi %7, %17 : vector<32x128xi32>
    %19 = arith.select %16, %18, %7 : vector<32x128xi1>, vector<32x128xi32>
    %c0_i32_5 = arith.constant 0 : i32
    %20 = vector.broadcast %c0_i32_5 : i32 to vector<32x128xi32>
    %21 = arith.cmpi eq, %19, %20 : vector<32x128xi32>
    %22 = arith.select %21, %2, %1 : vector<32x128xi1>, vector<32x128xf32>
    %c15_i32 = arith.constant 15 : i32
    %23 = vector.broadcast %c15_i32 : i32 to vector<32x128xi32>
    %24 = arith.cmpi eq, %19, %23 : vector<32x128xi32>
    %25 = arith.select %24, %22, %2 : vector<32x128xi1>, vector<32x128xf32>
    %26 = arith.truncf %22 : vector<32x128xf32> to vector<32x128xbf16>
    %c0_6 = arith.constant 0 : index
    %c0_7 = arith.constant 0 : index
    %c0_8 = arith.constant 0 : index
    %27 = vector.load %arg2[%c0_6, %c0_7, %c0_8] : memref<3x128x128xbf16, #tpu.memory_space<vmem>>, vector<1x128x128xbf16>
    %28 = vector.shape_cast %27 : vector<1x128x128xbf16> to vector<128x128xbf16>
    %cst = arith.constant dense<0.000000e+00> : vector<32x128xf32>
    %29 = tpu.matmul %26, %28, %cst {dimension_numbers = #tpu.dot_dimension_numbers<[1], [0], [0], [1], [0, 0, 1, 1], [], []>} : vector<32x128xbf16>, vector<128x128xbf16>, vector<32x128xf32> -> vector<32x128xf32>
    %30 = arith.truncf %0 : vector<32x128xf32> to vector<32x128xbf16>
    %c1 = arith.constant 1 : index
    %c0_9 = arith.constant 0 : index
    %c0_10 = arith.constant 0 : index
    %31 = vector.load %arg2[%c1, %c0_9, %c0_10] : memref<3x128x128xbf16, #tpu.memory_space<vmem>>, vector<1x128x128xbf16>
    %32 = vector.shape_cast %31 : vector<1x128x128xbf16> to vector<128x128xbf16>
    %cst_11 = arith.constant dense<0.000000e+00> : vector<32x128xf32>
    %33 = tpu.matmul %30, %32, %cst_11 {dimension_numbers = #tpu.dot_dimension_numbers<[1], [0], [0], [1], [0, 0, 1, 1], [], []>} : vector<32x128xbf16>, vector<128x128xbf16>, vector<32x128xf32> -> vector<32x128xf32>
    %34 = arith.addf %29, %33 : vector<32x128xf32>
    %35 = arith.truncf %25 : vector<32x128xf32> to vector<32x128xbf16>
    %c2 = arith.constant 2 : index
    %c0_12 = arith.constant 0 : index
    %c0_13 = arith.constant 0 : index
    %36 = vector.load %arg2[%c2, %c0_12, %c0_13] : memref<3x128x128xbf16, #tpu.memory_space<vmem>>, vector<1x128x128xbf16>
    %37 = vector.shape_cast %36 : vector<1x128x128xbf16> to vector<128x128xbf16>
    %cst_14 = arith.constant dense<0.000000e+00> : vector<32x128xf32>
    %38 = tpu.matmul %35, %37, %cst_14 {dimension_numbers = #tpu.dot_dimension_numbers<[1], [0], [0], [1], [0, 0, 1, 1], [], []>} : vector<32x128xbf16>, vector<128x128xbf16>, vector<32x128xf32> -> vector<32x128xf32>
    %39 = arith.addf %34, %38 : vector<32x128xf32>
    %40 = arith.truncf %39 : vector<32x128xf32> to vector<32x128xbf16>
    %c0_15 = arith.constant 0 : index
    %c0_16 = arith.constant 0 : index
    %41 = vector.load %arg4[%c0_15, %c0_16] : memref<32x128xbf16, #tpu.memory_space<vmem>>, vector<32x128xbf16>
    tpu.vector_store %arg4[%c0_15, %c0_16], %40 {strides = array<i32>} : memref<32x128xbf16, #tpu.memory_space<vmem>>, vector<32x128xbf16>,
    %cst_17 = arith.constant dense<0.000000e+00> : vector<128xf32>
    %42 = vector.multi_reduction <add>, %39, %cst_17 [0] : vector<32x128xf32> to vector<128xf32>
    %43 = vector.shape_cast %42 : vector<128xf32> to vector<1x128xf32>
    %44 = arith.mulf %39, %39 : vector<32x128xf32>
    %cst_18 = arith.constant dense<0.000000e+00> : vector<128xf32>
    %45 = vector.multi_reduction <add>, %44, %cst_18 [0] : vector<32x128xf32> to vector<128xf32>
    %46 = vector.shape_cast %45 : vector<128xf32> to vector<1x128xf32>
    %cst_19 = arith.constant 0.000000e+00 : f32
    %47 = vector.broadcast %cst_19 : f32 to vector<6x128xf32>
    %48 = tpu.concatenate %43, %46, %47 in 0 : vector<1x128xf32>, vector<1x128xf32>, vector<6x128xf32> -> vector<8x128xf32>
    %c0_20 = arith.constant 0 : index
    %c0_21 = arith.constant 0 : index
    %49 = vector.load %arg3[%c0_20, %c0_21] : memref<128x128xf32, #tpu.memory_space<vmem>>, vector<128x128xf32>
    %cst_22 = arith.constant dense<0.000000e+00> : vector<8x128xf32>
    %50 = tpu.matmul %48, %49, %cst_22 {dimension_numbers = #tpu.dot_dimension_numbers<[1], [0], [0], [1], [0, 0, 1, 1], [], []>} : vector<8x128xf32>, vector<128x128xf32>, vector<8x128xf32> -> vector<8x128xf32>
    %c0_23 = arith.constant 0 : index
    %c0_24 = arith.constant 0 : index
    %c0_25 = arith.constant 0 : index
    %51 = vector.load %arg5[%c0_23, %c0_24, %c0_25] : memref<1x8x128xf32, #tpu.memory_space<vmem>>, vector<1x8x128xf32>
    %52 = vector.shape_cast %51 : vector<1x8x128xf32> to vector<8x128xf32>
    %53 = vector.shape_cast %50 : vector<8x128xf32> to vector<1x8x128xf32>
    tpu.vector_store %arg5[%c0_23, %c0_24, %c0_25], %53 {strides = array<i32>} : memref<1x8x128xf32, #tpu.memory_space<vmem>>, vector<1x8x128xf32>,
    return
  }
  func.func @transform_0(%arg0: i32) -> (i32, i32) {
    %c0_i32 = arith.constant 0 : i32
    %c0_i32_0 = arith.constant 0 : i32
    return %arg0, %c0_i32 : i32, i32
  }
  func.func @transform_1(%arg0: i32) -> (i32, i32, i32) {
    %c0_i32 = arith.constant 0 : i32
    %c0_i32_0 = arith.constant 0 : i32
    %c0_i32_1 = arith.constant 0 : i32
    %c0_i32_2 = arith.constant 0 : i32
    return %c0_i32, %c0_i32_0, %c0_i32_1 : i32, i32, i32
  }
  func.func @transform_2(%arg0: i32) -> (i32, i32) {
    %c0_i32 = arith.constant 0 : i32
    %c0_i32_0 = arith.constant 0 : i32
    %c0_i32_1 = arith.constant 0 : i32
    return %c0_i32, %c0_i32_0 : i32, i32
  }
  func.func @transform_3(%arg0: i32) -> (i32, i32) {
    %c0_i32 = arith.constant 0 : i32
    %c0_i32_0 = arith.constant 0 : i32
    return %arg0, %c0_i32 : i32, i32
  }
  func.func @transform_4(%arg0: i32) -> (i32, i32, i32) {
    %c0_i32 = arith.constant 0 : i32
    %c0_i32_0 = arith.constant 0 : i32
    %c0_i32_1 = arith.constant 0 : i32
    return %arg0, %c0_i32, %c0_i32_0 : i32, i32, i32
  }
}

</mosaic_0001>

<llo_original>
// kernel: tpu_custom_call.1
$region0: #{tpu_custom_call.1}
  #allocation0 [shape = 'u32[]', space=smem, size = 0x4, offset = 0x4, fixed_abs, tag = 'smem constant byte address 0x4 - core index']
  #allocation1 [shape = 'u32[144,128]{1,0:T(1,128)}', space=vmem, size = 0x12000, scoped, tag = 'internal scratch']
  %s0 = inlined_call_operand.hbm [shape: f32[32,128], index: 0, kind: input, shape index: {}]
  %s1 = inlined_call_operand.hbm [shape: bf16[3,128,128], index: 1, kind: input, shape index: {}]
  %s2 = inlined_call_operand.hbm [shape: f32[128,128], index: 2, kind: input, shape index: {}]
  %s3 = inlined_call_operand.hbm [shape: bf16[32,128], index: 3, kind: output, shape index: {0}]
  %s4 = inlined_call_operand.hbm [shape: f32[1,8,128], index: 4, kind: output, shape index: {1}]
  %5 = xla_tuple %s3, %s4
  %s6 = sld [smem:[#allocation0]]
  $region42: #{tpu_custom_call.1} parent=0
    _
  %s8 = ssub.s32 1, %s6
  %s9 = scalar_select 0, %s8, %s6
  $region1: #{tpu_custom_call.1} parent=0
    #allocation2 [shape = 'u8[16384]{0}', space=vmem, size = 0x4000, scoped, tag = 'input window, operand 0, single buffered']
    #allocation3 [shape = 's32[1]{0}', space=sflag, size = 0x4, scoped, tag = 'scoped memory for tpu_custom_call.1']
    #allocation4 [shape = 's32[1]{0}', space=sflag, size = 0x4, scoped, tag = 'scoped memory for tpu_custom_call.1']
    #allocation5 [shape = 'u8[98304]{0}', space=vmem, size = 0x18000, scoped, tag = 'input window, operand 1, single buffered']
    #allocation6 [shape = 's32[1]{0}', space=sflag, size = 0x4, scoped, tag = 'scoped memory for tpu_custom_call.1']
    #allocation7 [shape = 'u8[65536]{0}', space=vmem, size = 0x10000, scoped, tag = 'input window, operand 2, single buffered']
    #allocation8 [shape = 'u8[8192]{0}', space=vmem, size = 0x2000, scoped, tag = 'output window, operand 0, single buffered']
    #allocation9 [shape = 'u8[4096]{0}', space=vmem, size = 0x1000, scoped, tag = 'output window, operand 1, single buffered']
    #allocation10 [shape = 's32[1]{0}', space=sflag, size = 0x4, scoped, tag = 'scoped memory for tpu_custom_call.1']
    %10 = vsyncpa [#allocation3], 0
    %11 = vsyncpa [#allocation6], 0
    %12 = vsyncpa [#allocation4], 0
    %13 = vsyncpa [#allocation10], 0
    // Predicated region
    $region2: #{tpu_custom_call.1} parent=1 // pred_check
      _
    $region3: #{tpu_custom_call.1} parent=1 // pred_check_branch
      %15 = sbr.rel (0) target = $region5
    $region4: #{tpu_custom_call.1} parent=1 // pred_region
      %s17 = ssub.s32 512, 512
      %18 = vsyncadd [#allocation3], %s17
      %s19 = sshll.u32 [#allocation2], 4
      %s20 = int_to_ptr.vmem [resolvable:$true] %s19
      %25 = dma.hbm_to_vmem [thread:$0]  %s0, 512, %s20, [#allocation3], 128, 128, 8
    $region5: #{tpu_custom_call.1} parent=1 // pred_fallthru
      _
    // Predicated region
    $region6: #{tpu_custom_call.1} parent=1 // pred_check
      _
    $region7: #{tpu_custom_call.1} parent=1 // pred_check_branch
      %27 = sbr.rel (0) target = $region9
    $region8: #{tpu_custom_call.1} parent=1 // pred_region
      %s29 = ssub.s32 3072, 3072
      %30 = vsyncadd [#allocation6], %s29
      %s31 = sshll.u32 [#allocation5], 4
      %s32 = int_to_ptr.vmem [resolvable:$true] %s31
      %37 = dma.hbm_to_vmem [thread:$0]  %s1, 3072, %s32, [#allocation6], 64, 64, 4
    $region9: #{tpu_custom_call.1} parent=1 // pred_fallthru
      _
    // Predicated region
    $region10: #{tpu_custom_call.1} parent=1 // pred_check
      _
    $region11: #{tpu_custom_call.1} parent=1 // pred_check_branch
      %39 = sbr.rel (0) target = $region13
    $region12: #{tpu_custom_call.1} parent=1 // pred_region
      %s41 = ssub.s32 2048, 2048
      %42 = vsyncadd [#allocation6], %s41
      %s43 = sshll.u32 [#allocation7], 4
      %s44 = int_to_ptr.vmem [resolvable:$true] %s43
      %49 = dma.hbm_to_vmem [thread:$0]  %s2, 2048, %s44, [#allocation6], 128, 128, 8
    $region13: #{tpu_custom_call.1} parent=1 // pred_fallthru
      _
    // Predicated region
    $region14: #{tpu_custom_call.1} parent=1 // pred_check
      _
    $region15: #{tpu_custom_call.1} parent=1 // pred_check_branch
      %51 = sbr.rel (0) target = $region17
    $region16: #{tpu_custom_call.1} parent=1 // pred_region
      %52 = dma.done [#allocation3], 512
    $region17: #{tpu_custom_call.1} parent=1 // pred_fallthru
      _
    // Predicated region
    $region18: #{tpu_custom_call.1} parent=1 // pred_check
      _
    $region19: #{tpu_custom_call.1} parent=1 // pred_check_branch
      %54 = sbr.rel (0) target = $region21
    $region20: #{tpu_custom_call.1} parent=1 // pred_region
      %55 = dma.done [#allocation6], 3072
    $region21: #{tpu_custom_call.1} parent=1 // pred_fallthru
      _
    // Predicated region
    $region22: #{tpu_custom_call.1} parent=1 // pred_check
      _
    $region23: #{tpu_custom_call.1} parent=1 // pred_check_branch
      %57 = sbr.rel (0) target = $region25
    $region24: #{tpu_custom_call.1} parent=1 // pred_region
      %58 = dma.done [#allocation6], 2048
    $region25: #{tpu_custom_call.1} parent=1 // pred_fallthru
      _
    %v60 = vld [vmem:[#allocation2] sm:$0xff]
    %v61 = vld [vmem:[#allocation2 + $0x8] sm:$0xff]
    %v62 = vld [vmem:[#allocation2 + $0x10] sm:$0xff]
    %v63 = vld [vmem:[#allocation2 + $0x18] sm:$0xff]
    %v64 = vrot.slane %v60, 7
    %v65 = vrot.slane %v61, 7
    %v66 = vrot.slane %v62, 7
    %v67 = vrot.slane %v63, 7
    %v68 = vlaneseq
    %v69 = vshrl.u32 %v68, 7
    %vm70 = vcmp.lt.s32.totalorder %v69, 1
    %v71 = vsel %vm70, %v66, %v67
    %v72 = vsel %vm70, %v65, %v66
    %v73 = vsel %vm70, %v64, %v65
    %v74 = vsel %vm70, %v67, %v64
    %v75 = vrot.slane %v60, 1
    %v76 = vrot.slane %v61, 1
    %v77 = vrot.slane %v62, 1
    %v78 = vrot.slane %v63, 1
    %vm79 = vcmp.lt.s32.totalorder %v69, 7
    %v80 = vsel %vm79, %v77, %v78
    %v81 = vsel %vm79, %v76, %v77
    %v82 = vsel %vm79, %v75, %v76
    %v83 = vsel %vm79, %v78, %v75
    %v84 = vadd.s32 %v69, 8
    %v85 = vadd.s32 %v69, 16
    %v86 = vadd.s32 %v69, 24
    %vm87 = vcmp.lt.s32.totalorder %v69, 0
    %v88 = vsub.s32 0, %v69
    %v89 = vsel %vm87, %v88, %v69
    %v90 = vshrl.u32 %v89, 4
    %v91 = vand.u32 %v89, 15
    %v92 = vsub.s32 0, %v91
    %v93 = vsel %vm87, %v92, %v91
    %vm94 = vcmp.lt.s32.totalorder %v84, 0
    %v95 = vsub.s32 0, %v84
    %v96 = vsel %vm94, %v95, %v84
    %v97 = vshrl.u32 %v96, 4
    %v98 = vand.u32 %v96, 15
    %v99 = vsub.s32 0, %v98
    %v100 = vsel %vm94, %v99, %v98
    %vm101 = vcmp.lt.s32.totalorder %v85, 0
    %v102 = vsub.s32 0, %v85
    %v103 = vsel %vm101, %v102, %v85
    %v104 = vshrl.u32 %v103, 4
    %v105 = vand.u32 %v103, 15
    %v106 = vsub.s32 0, %v105
    %v107 = vsel %vm101, %v106, %v105
    %vm108 = vcmp.lt.s32.totalorder %v86, 0
    %v109 = vsub.s32 0, %v86
    %v110 = vsel %vm108, %v109, %v86
    %v111 = vshrl.u32 %v110, 4
    %v112 = vand.u32 %v110, 15
    %v113 = vsub.s32 0, %v112
    %v114 = vsel %vm108, %v113, %v112
    %vm115 = vcmp.ne.s32.totalorder %v93, 0
    %vm116 = vcmp.ne.s32.totalorder %v100, 0
    %vm117 = vcmp.ne.s32.totalorder %v107, 0
    %vm118 = vcmp.ne.s32.totalorder %v114, 0
    %vm119 = vcmp.lt.s32.totalorder %v93, 0
    %vm120 = vcmp.lt.s32.totalorder %v100, 0
    %vm121 = vcmp.lt.s32.totalorder %v107, 0
    %vm122 = vcmp.lt.s32.totalorder %v114, 0
    %vm123 = vmand %vm119, %vm115
    %vm124 = vmand %vm120, %vm116
    %vm125 = vmand %vm121, %vm117
    %vm126 = vmand %vm122, %vm118
    %v127 = vadd.s32 %v93, 16
    %v128 = vadd.s32 %v100, 16
    %v129 = vadd.s32 %v107, 16
    %v130 = vadd.s32 %v114, 16
    %v131 = vsel %vm123, %v127, %v93
    %v132 = vsel %vm124, %v128, %v100
    %v133 = vsel %vm125, %v129, %v107
    %v134 = vsel %vm126, %v130, %v114
    %vm135 = vcmp.eq.s32.totalorder %v131, 0
    %vm136 = vcmp.eq.s32.totalorder %v132, 0
    %vm137 = vcmp.eq.s32.totalorder %v133, 0
    %vm138 = vcmp.eq.s32.totalorder %v134, 0
    %v139 = vsel %vm135, %v82, %v74
    %v140 = vsel %vm136, %v81, %v73
    %v141 = vsel %vm137, %v80, %v72
    %v142 = vsel %vm138, %v83, %v71
    %vm143 = vcmp.eq.s32.totalorder %v131, 15
    %vm144 = vcmp.eq.s32.totalorder %v132, 15
    %vm145 = vcmp.eq.s32.totalorder %v133, 15
    %vm146 = vcmp.eq.s32.totalorder %v134, 15
    %v147 = vsel %vm143, %v139, %v82
    %v148 = vsel %vm144, %v140, %v81
    %v149 = vsel %vm145, %v141, %v80
    %v150 = vsel %vm146, %v142, %v83
    %v151 = vpack.c.bf16 %v140, %v139
    %v152 = vpack.c.bf16 %v142, %v141
    %v153 = vld [vmem:[#allocation5] sm:$0xf]
    %v154 = vld [vmem:[#allocation5 + $0x4] sm:$0xf]
    %v155 = vld [vmem:[#allocation5 + $0x8] sm:$0xf]
    %v156 = vld [vmem:[#allocation5 + $0xc] sm:$0xf]
    %v157 = vld [vmem:[#allocation5 + $0x10] sm:$0xf]
    %v158 = vld [vmem:[#allocation5 + $0x14] sm:$0xf]
    %v159 = vld [vmem:[#allocation5 + $0x18] sm:$0xf]
    %v160 = vld [vmem:[#allocation5 + $0x1c] sm:$0xf]
    %v161 = vld [vmem:[#allocation5 + $0x20] sm:$0xf]
    %v162 = vld [vmem:[#allocation5 + $0x24] sm:$0xf]
    %v163 = vld [vmem:[#allocation5 + $0x28] sm:$0xf]
    %v164 = vld [vmem:[#allocation5 + $0x2c] sm:$0xf]
    %v165 = vld [vmem:[#allocation5 + $0x30] sm:$0xf]
    %v166 = vld [vmem:[#allocation5 + $0x34] sm:$0xf]
    %v167 = vld [vmem:[#allocation5 + $0x38] sm:$0xf]
    %v168 = vld [vmem:[#allocation5 + $0x3c] sm:$0xf]
    %v169 = vpack.c.bf16 %v61, %v60
    %v170 = vpack.c.bf16 %v63, %v62
    %s171 = scalar_lea.vmem [#allocation5], 64
    %v172 = vld [vmem:[%s171] sm:$0xf]
    %v173 = vld [vmem:[%s171 + $0x4] sm:$0xf]
    %v174 = vld [vmem:[%s171 + $0x8] sm:$0xf]
    %v175 = vld [vmem:[%s171 + $0xc] sm:$0xf]
    %v176 = vld [vmem:[%s171 + $0x10] sm:$0xf]
    %v177 = vld [vmem:[%s171 + $0x14] sm:$0xf]
    %v178 = vld [vmem:[%s171 + $0x18] sm:$0xf]
    %v179 = vld [vmem:[%s171 + $0x1c] sm:$0xf]
    %v180 = vld [vmem:[%s171 + $0x20] sm:$0xf]
    %v181 = vld [vmem:[%s171 + $0x24] sm:$0xf]
    %v182 = vld [vmem:[%s171 + $0x28] sm:$0xf]
    %v183 = vld [vmem:[%s171 + $0x2c] sm:$0xf]
    %v184 = vld [vmem:[%s171 + $0x30] sm:$0xf]
    %v185 = vld [vmem:[%s171 + $0x34] sm:$0xf]
    %v186 = vld [vmem:[%s171 + $0x38] sm:$0xf]
    %v187 = vld [vmem:[%s171 + $0x3c] sm:$0xf]
    %v204 = vunpack.c.l.b16 %v172
    %v205 = vunpack.c.l.b16 %v173
    %v206 = vunpack.c.l.b16 %v174
    %v207 = vunpack.c.l.b16 %v175
    %v208 = vunpack.c.l.b16 %v176
    %v209 = vunpack.c.l.b16 %v177
    %v210 = vunpack.c.l.b16 %v178
    %v211 = vunpack.c.l.b16 %v179
    %v212 = vunpack.c.l.b16 %v180
    %v213 = vunpack.c.l.b16 %v181
    %v214 = vunpack.c.l.b16 %v182
    %v215 = vunpack.c.l.b16 %v183
    %v216 = vunpack.c.l.b16 %v184
    %v217 = vunpack.c.l.b16 %v185
    %v218 = vunpack.c.l.b16 %v186
    %v219 = vunpack.c.l.b16 %v187
    %v220 = vpack.c.b16 %v205, %v204
    %v221 = vpack.c.b16 %v207, %v206
    %v222 = vpack.c.b16 %v209, %v208
    %v223 = vpack.c.b16 %v211, %v210
    %v224 = vpack.c.b16 %v213, %v212
    %v225 = vpack.c.b16 %v215, %v214
    %v226 = vpack.c.b16 %v217, %v216
    %v227 = vpack.c.b16 %v219, %v218
    %236 = vmatprep.subr.bf16.mxu0 0
    %237 = vmatpush1.bf16.msra.mxu0 %v220
    %238 = vmatprep.subr.bf16.mxu0 0
    %239 = vmatpush1.bf16.msra.mxu0 %v221
    %240 = vmatprep.subr.bf16.mxu0 0
    %241 = vmatpush1.bf16.msra.mxu0 %v222
    %242 = vmatprep.subr.bf16.mxu0 0
    %243 = vmatpush1.bf16.msra.mxu0 %v223
    %244 = vmatprep.subr.bf16.mxu0 0
    %245 = vmatpush1.bf16.msra.mxu0 %v224
    %246 = vmatprep.subr.bf16.mxu0 0
    %247 = vmatpush1.bf16.msra.mxu0 %v225
    %248 = vmatprep.subr.bf16.mxu0 0
    %249 = vmatpush1.bf16.msra.mxu0 %v226
    %250 = vmatprep.subr.bf16.mxu0 0
    %251 = vmatpush1.bf16.msra.mxu0 %v227
    %252 = vmatprep.subr.bf16.mxu0 0
    %253 = vmatpush1.bf16.msra.mxu0 0
    %254 = vmatprep.subr.bf16.mxu0 0
    %255 = vmatpush1.bf16.msra.mxu0 0
    %256 = vmatprep.subr.bf16.mxu0 0
    %257 = vmatpush1.bf16.msra.mxu0 0
    %258 = vmatprep.subr.bf16.mxu0 0
    %259 = vmatpush1.bf16.msra.mxu0 0
    %260 = vmatprep.subr.bf16.mxu0 0
    %261 = vmatpush1.bf16.msra.mxu0 0
    %262 = vmatprep.subr.bf16.mxu0 0
    %263 = vmatpush1.bf16.msra.mxu0 0
    %264 = vmatprep.subr.bf16.mxu0 0
    %265 = vmatpush1.bf16.msra.mxu0 0
    %266 = vmatprep.subr.bf16.mxu0 0
    %267 = vmatpush1.bf16.msra.mxu0 0
    %268 = vmatprep.mubr.bf16.mxu0 0
    %269 = vmatmul.mubr.bf16.gmra.mrb[0].mxu0 %v169
    %v270 = vpop.f32.mrb[0].mxu0
    %v271 = vadd.f32 0.0, %v270
    %v272 = vpop.f32.mrb[0].mxu0
    %v273 = vpop.f32.mrb[0].mxu0
    %v274 = vadd.f32 0.0, %v273
    %v275 = vpop.f32.mrb[0].mxu0
    %276 = vmatprep.mubr.bf16.mxu0 0
    %277 = vmatmul.mubr.bf16.gmra.mrb[0].mxu0 %v170
    %v278 = vpop.f32.mrb[0].mxu0
    %v279 = vadd.f32 0.0, %v278
    %v280 = vpop.f32.mrb[0].mxu0
    %v281 = vpop.f32.mrb[0].mxu0
    %v282 = vadd.f32 0.0, %v281
    %v283 = vpop.f32.mrb[0].mxu0
    %284 = vdwg.mxu0
    %v301 = vunpack.c.l.b16 %v153
    %v302 = vunpack.c.l.b16 %v154
    %v303 = vunpack.c.l.b16 %v155
    %v304 = vunpack.c.l.b16 %v156
    %v305 = vunpack.c.l.b16 %v157
    %v306 = vunpack.c.l.b16 %v158
    %v307 = vunpack.c.l.b16 %v159
    %v308 = vunpack.c.l.b16 %v160
    %v309 = vunpack.c.l.b16 %v161
    %v310 = vunpack.c.l.b16 %v162
    %v311 = vunpack.c.l.b16 %v163
    %v312 = vunpack.c.l.b16 %v164
    %v313 = vunpack.c.l.b16 %v165
    %v314 = vunpack.c.l.b16 %v166
    %v315 = vunpack.c.l.b16 %v167
    %v316 = vunpack.c.l.b16 %v168
    %v317 = vpack.c.b16 %v302, %v301
    %v318 = vpack.c.b16 %v304, %v303
    %v319 = vpack.c.b16 %v306, %v305
    %v320 = vpack.c.b16 %v308, %v307
    %v321 = vpack.c.b16 %v310, %v309
    %v322 = vpack.c.b16 %v312, %v311
    %v323 = vpack.c.b16 %v314, %v313
    %v324 = vpack.c.b16 %v316, %v315
    %333 = vmatprep.subr.bf16.mxu0 0
    %334 = vmatpush1.bf16.msra.mxu0 %v317
    %335 = vmatprep.subr.bf16.mxu0 0
    %336 = vmatpush1.bf16.msra.mxu0 %v318
    %337 = vmatprep.subr.bf16.mxu0 0
    %338 = vmatpush1.bf16.msra.mxu0 %v319
    %339 = vmatprep.subr.bf16.mxu0 0
    %340 = vmatpush1.bf16.msra.mxu0 %v320
    %341 = vmatprep.subr.bf16.mxu0 0
    %342 = vmatpush1.bf16.msra.mxu0 %v321
    %343 = vmatprep.subr.bf16.mxu0 0
    %344 = vmatpush1.bf16.msra.mxu0 %v322
    %345 = vmatprep.subr.bf16.mxu0 0
    %346 = vmatpush1.bf16.msra.mxu0 %v323
    %347 = vmatprep.subr.bf16.mxu0 0
    %348 = vmatpush1.bf16.msra.mxu0 %v324
    %349 = vmatprep.subr.bf16.mxu0 0
    %350 = vmatpush1.bf16.msra.mxu0 0
    %351 = vmatprep.subr.bf16.mxu0 0
    %352 = vmatpush1.bf16.msra.mxu0 0
    %353 = vmatprep.subr.bf16.mxu0 0
    %354 = vmatpush1.bf16.msra.mxu0 0
    %355 = vmatprep.subr.bf16.mxu0 0
    %356 = vmatpush1.bf16.msra.mxu0 0
    %357 = vmatprep.subr.bf16.mxu0 0
    %358 = vmatpush1.bf16.msra.mxu0 0
    %359 = vmatprep.subr.bf16.mxu0 0
    %360 = vmatpush1.bf16.msra.mxu0 0
    %361 = vmatprep.subr.bf16.mxu0 0
    %362 = vmatpush1.bf16.msra.mxu0 0
    %363 = vmatprep.subr.bf16.mxu0 0
    %364 = vmatpush1.bf16.msra.mxu0 0
    %365 = vmatprep.mubr.bf16.mxu0 0
    %366 = vmatmul.mubr.bf16.gmra.mrb[0].mxu0 %v151
    %v367 = vpop.f32.mrb[0].mxu0
    %v368 = vadd.f32 %v271, %v367
    %v369 = vpop.f32.mrb[0].mxu0
    %v370 = vpop.f32.mrb[0].mxu0
    %v371 = vadd.f32 %v274, %v370
    %v372 = vpop.f32.mrb[0].mxu0
    %373 = vmatprep.mubr.bf16.mxu0 0
    %374 = vmatmul.mubr.bf16.gmra.mrb[0].mxu0 %v152
    %v375 = vpop.f32.mrb[0].mxu0
    %v376 = vadd.f32 %v279, %v375
    %v377 = vpop.f32.mrb[0].mxu0
    %v378 = vpop.f32.mrb[0].mxu0
    %v379 = vadd.f32 %v282, %v378
    %v380 = vpop.f32.mrb[0].mxu0
    %381 = vdwg.mxu0
    %v382 = vpack.c.bf16 %v148, %v147
    %v383 = vpack.c.bf16 %v150, %v149
    %s384 = scalar_lea.vmem [#allocation5], 128
    %v385 = vld [vmem:[%s384] sm:$0xf]
    %v386 = vld [vmem:[%s384 + $0x4] sm:$0xf]
    %v387 = vld [vmem:[%s384 + $0x8] sm:$0xf]
    %v388 = vld [vmem:[%s384 + $0xc] sm:$0xf]
    %v389 = vld [vmem:[%s384 + $0x10] sm:$0xf]
    %v390 = vld [vmem:[%s384 + $0x14] sm:$0xf]
    %v391 = vld [vmem:[%s384 + $0x18] sm:$0xf]
    %v392 = vld [vmem:[%s384 + $0x1c] sm:$0xf]
    %v393 = vld [vmem:[%s384 + $0x20] sm:$0xf]
    %v394 = vld [vmem:[%s384 + $0x24] sm:$0xf]
    %v395 = vld [vmem:[%s384 + $0x28] sm:$0xf]
    %v396 = vld [vmem:[%s384 + $0x2c] sm:$0xf]
    %v397 = vld [vmem:[%s384 + $0x30] sm:$0xf]
    %v398 = vld [vmem:[%s384 + $0x34] sm:$0xf]
    %v399 = vld [vmem:[%s384 + $0x38] sm:$0xf]
    %v400 = vld [vmem:[%s384 + $0x3c] sm:$0xf]
    %v417 = vunpack.c.l.b16 %v385
    %v418 = vunpack.c.l.b16 %v386
    %v419 = vunpack.c.l.b16 %v387
    %v420 = vunpack.c.l.b16 %v388
    %v421 = vunpack.c.l.b16 %v389
    %v422 = vunpack.c.l.b16 %v390
    %v423 = vunpack.c.l.b16 %v391
    %v424 = vunpack.c.l.b16 %v392
    %v425 = vunpack.c.l.b16 %v393
    %v426 = vunpack.c.l.b16 %v394
    %v427 = vunpack.c.l.b16 %v395
    %v428 = vunpack.c.l.b16 %v396
    %v429 = vunpack.c.l.b16 %v397
    %v430 = vunpack.c.l.b16 %v398
    %v431 = vunpack.c.l.b16 %v399
    %v432 = vunpack.c.l.b16 %v400
    %v433 = vpack.c.b16 %v418, %v417
    %v434 = vpack.c.b16 %v420, %v419
    %v435 = vpack.c.b16 %v422, %v421
    %v436 = vpack.c.b16 %v424, %v423
    %v437 = vpack.c.b16 %v426, %v425
    %v438 = vpack.c.b16 %v428, %v427
    %v439 = vpack.c.b16 %v430, %v429
    %v440 = vpack.c.b16 %v432, %v431
    %449 = vmatprep.subr.bf16.mxu0 0
    %450 = vmatpush1.bf16.msra.mxu0 %v433
    %451 = vmatprep.subr.bf16.mxu0 0
    %452 = vmatpush1.bf16.msra.mxu0 %v434
    %453 = vmatprep.subr.bf16.mxu0 0
    %454 = vmatpush1.bf16.msra.mxu0 %v435
    %455 = vmatprep.subr.bf16.mxu0 0
    %456 = vmatpush1.bf16.msra.mxu0 %v436
    %457 = vmatprep.subr.bf16.mxu0 0
    %458 = vmatpush1.bf16.msra.mxu0 %v437
    %459 = vmatprep.subr.bf16.mxu0 0
    %460 = vmatpush1.bf16.msra.mxu0 %v438
    %461 = vmatprep.subr.bf16.mxu0 0
    %462 = vmatpush1.bf16.msra.mxu0 %v439
    %463 = vmatprep.subr.bf16.mxu0 0
    %464 = vmatpush1.bf16.msra.mxu0 %v440
    %465 = vmatprep.subr.bf16.mxu0 0
    %466 = vmatpush1.bf16.msra.mxu0 0
    %467 = vmatprep.subr.bf16.mxu0 0
    %468 = vmatpush1.bf16.msra.mxu0 0
    %469 = vmatprep.subr.bf16.mxu0 0
    %470 = vmatpush1.bf16.msra.mxu0 0
    %471 = vmatprep.subr.bf16.mxu0 0
    %472 = vmatpush1.bf16.msra.mxu0 0
    %473 = vmatprep.subr.bf16.mxu0 0
    %474 = vmatpush1.bf16.msra.mxu0 0
    %475 = vmatprep.subr.bf16.mxu0 0
    %476 = vmatpush1.bf16.msra.mxu0 0
    %477 = vmatprep.subr.bf16.mxu0 0
    %478 = vmatpush1.bf16.msra.mxu0 0
    %479 = vmatprep.subr.bf16.mxu0 0
    %480 = vmatpush1.bf16.msra.mxu0 0
    %481 = vmatprep.mubr.bf16.mxu0 0
    %482 = vmatmul.mubr.bf16.gmra.mrb[0].mxu0 %v382
    %v483 = vpop.f32.mrb[0].mxu0
    %v484 = vadd.f32 0.0, %v483
    %v485 = vpop.f32.mrb[0].mxu0
    %v486 = vpop.f32.mrb[0].mxu0
    %v487 = vadd.f32 0.0, %v486
    %v488 = vpop.f32.mrb[0].mxu0
    %489 = vmatprep.mubr.bf16.mxu0 0
    %490 = vmatmul.mubr.bf16.gmra.mrb[0].mxu0 %v383
    %v491 = vpop.f32.mrb[0].mxu0
    %v492 = vadd.f32 0.0, %v491
    %v493 = vpop.f32.mrb[0].mxu0
    %v494 = vpop.f32.mrb[0].mxu0
    %v495 = vadd.f32 0.0, %v494
    %v496 = vpop.f32.mrb[0].mxu0
    %497 = vdwg.mxu0
    %v498 = vadd.f32 %v368, %v484
    %v499 = vadd.f32 %v371, %v487
    %v500 = vadd.f32 %v376, %v492
    %v501 = vadd.f32 %v379, %v495
    %v502 = vpack.c.bf16 %v499, %v498
    %v503 = vpack.c.bf16 %v501, %v500
    %v506 = vunpack.c.l.b16 %v502
    %v507 = vunpack.c.h.b16 %v502
    %v508 = vunpack.c.l.b16 %v503
    %v509 = vunpack.c.h.b16 %v503
    %v510 = vpack.c.b16 %v506, %v506
    %v511 = vpack.c.b16 %v507, %v507
    %v512 = vpack.c.b16 %v508, %v508
    %v513 = vpack.c.b16 %v509, %v509
    %518 = vst [vmem:[#allocation8] sm:$0xf] %v510
    %519 = vst [vmem:[#allocation8 + $0x4] sm:$0xf] %v511
    %520 = vst [vmem:[#allocation8 + $0x8] sm:$0xf] %v512
    %521 = vst [vmem:[#allocation8 + $0xc] sm:$0xf] %v513
    %v522 = vadd.f32 %v498, %v499
    %v523 = vadd.f32 %v522, %v500
    %v524 = vadd.f32 %v523, %v501
    %v525 = vrot.slane %v524, 4
    %v526 = vadd.f32 %v524, %v525
    %v527 = vrot.slane %v526, 2
    %v528 = vadd.f32 %v526, %v527
    %v529 = vrot.slane %v528, 1
    %v530 = vadd.f32 %v528, %v529
    %v531 = vmul.f32 %v498, %v498
    %v532 = vmul.f32 %v499, %v499
    %v533 = vmul.f32 %v500, %v500
    %v534 = vmul.f32 %v501, %v501
    %v535 = vadd.f32 %v531, %v532
    %v536 = vadd.f32 %v535, %v533
    %v537 = vadd.f32 %v536, %v534
    %v538 = vrot.slane %v537, 4
    %v539 = vadd.f32 %v537, %v538
    %v540 = vrot.slane %v539, 2
    %v541 = vadd.f32 %v539, %v540
    %v542 = vrot.slane %v541, 1
    %v543 = vadd.f32 %v541, %v542
    %vm544 = vcmask 1040384
    %v545 = vsel %vm544, %v530, %v543
    %vm546 = vcmask 1041408
    %v547 = vsel %vm546, %v545, 0.0
    %v548 = vld [vmem:[#allocation7] sm:$0xff]
    %v549 = vld [vmem:[#allocation7 + $0x8] sm:$0xff]
    %v550 = vld [vmem:[#allocation7 + $0x10] sm:$0xff]
    %v551 = vld [vmem:[#allocation7 + $0x18] sm:$0xff]
    %v552 = vld [vmem:[#allocation7 + $0x20] sm:$0xff]
    %v553 = vld [vmem:[#allocation7 + $0x28] sm:$0xff]
    %v554 = vld [vmem:[#allocation7 + $0x30] sm:$0xff]
    %v555 = vld [vmem:[#allocation7 + $0x38] sm:$0xff]
    %v556 = vld [vmem:[#allocation7 + $0x40] sm:$0xff]
    %v557 = vld [vmem:[#allocation7 + $0x48] sm:$0xff]
    %v558 = vld [vmem:[#allocation7 + $0x50] sm:$0xff]
    %v559 = vld [vmem:[#allocation7 + $0x58] sm:$0xff]
    %v560 = vld [vmem:[#allocation7 + $0x60] sm:$0xff]
    %v561 = vld [vmem:[#allocation7 + $0x68] sm:$0xff]
    %v562 = vld [vmem:[#allocation7 + $0x70] sm:$0xff]
    %v563 = vld [vmem:[#allocation7 + $0x78] sm:$0xff]
    %564 = vmatprep.subr.mxu0 0.0
    %565 = vmatpush1.msra.mxu0 %v548
    %566 = vmatprep.subr.mxu0 0.0
    %567 = vmatpush1.msra.mxu0 %v549
    %568 = vmatprep.subr.mxu0 0.0
    %569 = vmatpush1.msra.mxu0 %v550
    %570 = vmatprep.subr.mxu0 0.0
    %571 = vmatpush1.msra.mxu0 %v551
    %572 = vmatprep.subr.mxu0 0.0
    %573 = vmatpush1.msra.mxu0 %v552
    %574 = vmatprep.subr.mxu0 0.0
    %575 = vmatpush1.msra.mxu0 %v553
    %576 = vmatprep.subr.mxu0 0.0
    %577 = vmatpush1.msra.mxu0 %v554
    %578 = vmatprep.subr.mxu0 0.0
    %579 = vmatpush1.msra.mxu0 %v555
    %580 = vmatprep.subr.mxu0 0.0
    %581 = vmatpush1.msra.mxu0 %v556
    %582 = vmatprep.subr.mxu0 0.0
    %583 = vmatpush1.msra.mxu0 %v557
    %584 = vmatprep.subr.mxu0 0.0
    %585 = vmatpush1.msra.mxu0 %v558
    %586 = vmatprep.subr.mxu0 0.0
    %587 = vmatpush1.msra.mxu0 %v559
    %588 = vmatprep.subr.mxu0 0.0
    %589 = vmatpush1.msra.mxu0 %v560
    %590 = vmatprep.subr.mxu0 0.0
    %591 = vmatpush1.msra.mxu0 %v561
    %592 = vmatprep.subr.mxu0 0.0
    %593 = vmatpush1.msra.mxu0 %v562
    %594 = vmatprep.subr.mxu0 0.0
    %595 = vmatpush1.msra.mxu0 %v563
    %596 = vmatprep.subr.mxu0 0.0
    %597 = vmatpush1.msra.mxu0 0.0
    %598 = vmatprep.subr.mxu0 0.0
    %599 = vmatpush1.msra.mxu0 0.0
    %600 = vmatprep.subr.mxu0 0.0
    %601 = vmatpush1.msra.mxu0 0.0
    %602 = vmatprep.subr.mxu0 0.0
    %603 = vmatpush1.msra.mxu0 0.0
    %604 = vmatprep.subr.mxu0 0.0
    %605 = vmatpush1.msra.mxu0 0.0
    %606 = vmatprep.subr.mxu0 0.0
    %607 = vmatpush1.msra.mxu0 0.0
    %608 = vmatprep.subr.mxu0 0.0
    %609 = vmatpush1.msra.mxu0 0.0
    %610 = vmatprep.subr.mxu0 0.0
    %611 = vmatpush1.msra.mxu0 0.0
    %612 = vmatprep.subr.mxu0 0.0
    %613 = vmatpush1.msra.mxu0 0.0
    %614 = vmatprep.subr.mxu0 0.0
    %615 = vmatpush1.msra.mxu0 0.0
    %616 = vmatprep.subr.mxu0 0.0
    %617 = vmatpush1.msra.mxu0 0.0
    %618 = vmatprep.subr.mxu0 0.0
    %619 = vmatpush1.msra.mxu0 0.0
    %620 = vmatprep.subr.mxu0 0.0
    %621 = vmatpush1.msra.mxu0 0.0
    %622 = vmatprep.subr.mxu0 0.0
    %623 = vmatpush1.msra.mxu0 0.0
    %624 = vmatprep.subr.mxu0 0.0
    %625 = vmatpush1.msra.mxu0 0.0
    %626 = vmatprep.subr.mxu0 0.0
    %627 = vmatpush1.msra.mxu0 0.0
    %628 = vmatprep.mubr.f32.mxu0 0.0
    %629 = vmatmul.mubr.f32.gmra.mrb[0].mxu0 %v547
    %v630 = vpop.f32.mrb[0].mxu0
    %v631 = vadd.f32 0.0, %v630
    %v632 = vpop.f32.mrb[0].mxu0
    %633 = vdwg.mxu0
    %634 = vst [vmem:[#allocation9] sm:$0xff] %v631
    // Predicated region
    $region26: #{tpu_custom_call.1} parent=1 // pred_check
      _
    $region27: #{tpu_custom_call.1} parent=1 // pred_check_branch
      %636 = sbr.rel (0) target = $region29
    $region28: #{tpu_custom_call.1} parent=1 // pred_region
      %s638 = ssub.s32 256, 256
      %639 = vsyncadd [#allocation4], %s638
      %s640 = sshll.u32 [#allocation8], 4
      %s641 = int_to_ptr.vmem [resolvable:$true] %s640
      %646 = dma.vmem_to_hbm [thread:$0]  %s641, 256, %s3, [#allocation4], 64, 64, 4
    $region29: #{tpu_custom_call.1} parent=1 // pred_fallthru
      _
    // Predicated region
    $region30: #{tpu_custom_call.1} parent=1 // pred_check
      _
    $region31: #{tpu_custom_call.1} parent=1 // pred_check_branch
      %648 = sbr.rel (0) target = $region33
    $region32: #{tpu_custom_call.1} parent=1 // pred_region
      %s650 = ssub.s32 128, 128
      %651 = vsyncadd [#allocation10], %s650
      %s653 = sshll.u32 [#allocation9], 4
      %s654 = int_to_ptr.vmem [resolvable:$true] %s653
      %656 = dma.vmem_to_hbm [thread:$0]  %s654, 128, %s4, [#allocation10]
    $region33: #{tpu_custom_call.1} parent=1 // pred_fallthru
      _
    // Predicated region
    $region34: #{tpu_custom_call.1} parent=1 // pred_check
      _
    $region35: #{tpu_custom_call.1} parent=1 // pred_check_branch
      %658 = sbr.rel (0) target = $region37
    $region36: #{tpu_custom_call.1} parent=1 // pred_region
      %659 = dma.done [#allocation4], 256
    $region37: #{tpu_custom_call.1} parent=1 // pred_fallthru
      _
    // Predicated region
    $region38: #{tpu_custom_call.1} parent=1 // pred_check
      _
    $region39: #{tpu_custom_call.1} parent=1 // pred_check_branch
      %661 = sbr.rel (0) target = $region41
    $region40: #{tpu_custom_call.1} parent=1 // pred_region
      %662 = dma.done [#allocation10], 128
    $region41: #{tpu_custom_call.1} parent=1 // pred_fallthru
      _
    %663 = vsyncpa [#allocation3], 1
    %664 = vsyncpa [#allocation6], 1
    %665 = vsyncpa [#allocation4], 1
    %666 = vsyncpa [#allocation10], 1

</llo_original>
